<compile_context>
chip_gen: v6e
topology: v6e:2x2x1
jax: 0.10.0
libtpu: 0.0.40
codegen_flags: <defaults>
</compile_context>

<pallas_src>
import math
import functools

import jax
import jax.numpy as jnp
from jax.experimental import pallas as pl
from jax.experimental.pallas import tpu as pltpu

_LANE = 128     # TPU lane width (last dim)
_SUBLANE = 8    # TPU sublane width (second-to-last dim)


def _round_up(n, m):
    return ((n + m - 1) // m) * m


def _gelu_erf(x):
    # Matches the PyTorch module exactly: x * 0.5 * (1 + erf(x / sqrt(2))).
    # Kept as erf (not the tanh approximation) to preserve forward semantics.
    return x * 0.5 * (1.0 + jax.lax.erf(x / math.sqrt(2.0)))


def highway_kernel(x_ref, wlg_ref, blg_ref, wfc_ref, bfc_ref, o_ref, *,
                   num_layers, dp, unroll_layers):
    """One row-tile through the whole highway stack + final projection.

    x_ref   : (tm, Dp)        activation rows (Dp = padded hidden)
    wlg_ref : (L, Dp, 2*Dp)   fused per-layer [linear | gate] weights
    blg_ref : (L, 1, 2*Dp)    fused per-layer [linear | gate] biases (f32)
    wfc_ref : (Dp, Hp)        final projection weight
    bfc_ref : (1, Hp)         final projection bias (f32)
    o_ref   : (tm, Hp)        output rows
    """
    w_dtype = wlg_ref.dtype                      # bf16 (default) or f32
    x = x_ref[...].astype(jnp.float32)           # gate math stays in f32

    def layer(i, x):
        # Single fused (tm, Dp) @ (Dp, 2*Dp) MXU pass per layer; columns
        # [0:Dp] -> H branch, [Dp:2*Dp] -> T branch (static 128-aligned split).
        ht = jnp.dot(x.astype(w_dtype), wlg_ref[i],
                     preferred_element_type=jnp.float32)
        ht = ht + blg_ref[i].astype(jnp.float32)      # (1, 2*Dp) row broadcast
        h = _gelu_erf(ht[:, :dp])
        t = jax.nn.sigmoid(ht[:, dp:])
        return x + t * (h - x)                        # 3 VPU ops per element

    if unroll_layers:
        for i in range(num_layers):                   # static unroll (small L)
            x = layer(i, x)
    else:
        x = jax.lax.fori_loop(0, num_layers, layer, x)

    out = jnp.dot(x.astype(w_dtype), wfc_ref[...],
                  preferred_element_type=jnp.float32)
    out = out + bfc_ref[...].astype(jnp.float32)
    o_ref[...] = out.astype(o_ref.dtype)


def highway_forward(x, params, *, row_tile=512, weights_dtype=jnp.bfloat16):
    """x: (B, T, D).  params: dict from init_highway_params ((in, out) weights).

    weights_dtype: jnp.bfloat16 (default, f32 accumulation on the MXU) or None
    for an exact f32 path (matches the reference to ~1e-5).
    """
    B, T, D = x.shape
    wl, bl = params["wl"], params["bl"]
    wg, bg = params["wg"], params["bg"]
    wfc, bfc = params["wfc"], params["bfc"]
    num_layers = int(wl.shape[0])
    h_out = wfc.shape[1]

    f32 = jnp.float32
    w_dtype = f32 if weights_dtype is None else weights_dtype
    w_itm = jnp.dtype(w_dtype).itemsize
    o_itm = jnp.dtype(x.dtype).itemsize

    dp = _round_up(D, _LANE)
    hp = _round_up(h_out, _LANE)
    M = B * T

    # ---- VMEM budget: physical capacity minus headroom for Mosaic scratch ----
    try:
        vmem_cap = int(pltpu.get_tpu_info().vmem_capacity_bytes)
    except Exception:
        vmem_cap = 64 * 1024 * 1024             # conservative default (v7x)
    vmem_limit = min(int(vmem_cap * 0.85), vmem_cap - (8 << 20))

    weight_bytes = (num_layers * dp * (2 * dp) * w_itm     # wlg
                    + num_layers * (2 * dp) * 4            # blg (f32)
                    + dp * hp * w_itm                      # wfc
                    + hp * 4)                              # bfc (f32)
    if weight_bytes > vmem_limit:
        # TODO(synk): stream per-layer weights from HBM (memory_space=pl.ANY +
        # make_async_copy double-buffering over the layer axis) when the fused
        # weight stack cannot stay VMEM-resident (very large D).
        pass

    def _vmem_estimate(tm):
        act = 2 * tm * dp * 4          # double-buffered f32 input rows
        out = 2 * tm * hp * o_itm      # double-buffered output rows
        tmp = 4 * tm * dp * 4          # ht + h/t intermediates (rough, f32)
        return weight_bytes + act + out + tmp

    # Shrink the max row tile until the estimate fits the VMEM budget.
    while row_tile > _SUBLANE and _vmem_estimate(row_tile) > vmem_limit:
        row_tile = max(_SUBLANE, _round_up(row_tile // 2, _SUBLANE))

    # Grid selection: no padded rows for small M; an even number of evenly
    # sized tiles otherwise, so v7x's 2 TensorCores split the grid evenly.
    if M <= row_tile:
        n_tiles = 1
        row_tile = max(_SUBLANE, _round_up(M, _SUBLANE))
    else:
        n_tiles = pl.cdiv(M, row_tile)
        if n_tiles % 2:
            n_tiles += 1
        row_tile = _round_up(pl.cdiv(M, n_tiles), _SUBLANE)
    mp = n_tiles * row_tile

    # Lane-dense zero padding is exact: padded x columns see zero weights/bias
    # -> h = 0, t = 0.5, x_new = x + t*(0 - 0) = 0 -> they stay zero forever
    # and never leak into real columns; padded rows are sliced off at the end.
    x2 = jnp.pad(x.reshape(M, D).astype(f32), ((0, mp - M), (0, dp - D)))

    wl_p = jnp.pad(wl.astype(f32), ((0, 0), (0, dp - D), (0, dp - D)))
    wg_p = jnp.pad(wg.astype(f32), ((0, 0), (0, dp - D), (0, dp - D)))
    wlg = jnp.concatenate([wl_p, wg_p], axis=-1).astype(w_dtype)   # (L, Dp, 2Dp)
    blg = jnp.concatenate(
        [jnp.pad(bl.astype(f32), ((0, 0), (0, dp - D))),
         jnp.pad(bg.astype(f32), ((0, 0), (0, dp - D)))],
        axis=-1).reshape(num_layers, 1, 2 * dp)                    # (L, 1, 2Dp) f32
    wfc_p = jnp.pad(wfc.astype(f32),
                    ((0, dp - D), (0, hp - h_out))).astype(w_dtype)  # (Dp, Hp)
    bfc_p = jnp.pad(bfc.astype(f32), (0, hp - h_out)).reshape(1, hp)  # (1, Hp) f32

    cost = pl.CostEstimate(
        flops=2 * mp * dp * (2 * num_layers * dp + hp),
        transcendentals=2 * num_layers * mp * dp,      # erf + sigmoid per layer
        bytes_accessed=mp * dp * 4 + weight_bytes + mp * hp * o_itm,
    )

    kernel = functools.partial(highway_kernel, num_layers=num_layers, dp=dp,
                               unroll_layers=(num_layers <= 4))

    def _call(single_buffer_weights):
        if single_buffer_weights:
            # Constant index_map inputs only need one buffer: halves their VMEM
            # footprint vs the default double-buffering.
            def wspec(shape, imap):
                return pl.BlockSpec(shape, imap, pipeline_mode=pl.Buffered(1))
        else:
            def wspec(shape, imap):
                return pl.BlockSpec(shape, imap)
        return pl.pallas_call(
            kernel,
            out_shape=jax.ShapeDtypeStruct((mp, hp), x.dtype),
            grid_spec=pltpu.PrefetchScalarGridSpec(
                num_scalar_prefetch=0,
                grid=(n_tiles,),
                in_specs=[
                    # Only the activation rows are streamed/pipelined over the grid.
                    pl.BlockSpec((row_tile, dp), lambda i: (i, 0)),
                    # Weights/biases: constant block index -> DMA'd once, VMEM-resident.
                    wspec((num_layers, dp, 2 * dp), lambda i: (0, 0, 0)),   # wl|wg fused
                    wspec((num_layers, 1, 2 * dp), lambda i: (0, 0, 0)),    # bl|bg fused
                    wspec((dp, hp), lambda i: (0, 0)),                      # wfc
                    wspec((1, hp), lambda i: (0, 0)),                       # bfc
                ],
                out_specs=pl.BlockSpec((row_tile, hp), lambda i: (i, 0)),
            ),
            compiler_params=pltpu.CompilerParams(
                dimension_semantics=("parallel",),
                vmem_limit_bytes=vmem_limit,
            ),
            cost_estimate=cost,
        )(x2, wlg, blg, wfc_p, bfc_p)

    try:
        out2 = _call(True)
    except Exception:
        # pipeline_mode=pl.Buffered(1) unavailable on this jax version ->
        # fall back to default (double) buffering; numerics are identical.
        out2 = _call(False)

    return out2[:M, :h_out].reshape(B, T, h_out)


def init_highway_params(key, h_size, h_out, num_layers=2, dtype=jnp.float32):
    """Deterministic init matching the PyTorch module's parameter shapes.
    Linear weights are stored pre-transposed as (in, out)."""
    keys = jax.random.split(key, 2 * num_layers * 2 + 2)
    k = iter(keys)
    bound = 1.0 / math.sqrt(h_size)

    def lin(kw, kb, n_in, n_out):
        w = jax.random.uniform(kw, (n_in, n_out), dtype, -bound, bound)
        b = jax.random.uniform(kb, (n_out,), dtype, -bound, bound)
        return w, b

    wl, bl, wg, bg = [], [], [], []
    for _ in range(num_layers):
        w, b = lin(next(k), next(k), h_size, h_size); wl.append(w); bl.append(b)
        w, b = lin(next(k), next(k), h_size, h_size); wg.append(w); bg.append(b)
    wfc, bfc = lin(next(k), next(k), h_size, h_out)
    return {
        "wl": jnp.stack(wl), "bl": jnp.stack(bl),
        "wg": jnp.stack(wg), "bg": jnp.stack(bg),
        "wfc": wfc, "bfc": bfc,
    }


def highway_reference(x, params):
    """Pure-JAX reference for correctness checking."""
    wl, bl, wg, bg = params["wl"], params["bl"], params["wg"], params["bg"]
    for i in range(wl.shape[0]):
        h = _gelu_erf(x @ wl[i] + bl[i])
        t = jax.nn.sigmoid(x @ wg[i] + bg[i])
        x = t * h + (1.0 - t) * x
    return x @ params["wfc"] + params["bfc"]


if __name__ == "__main__":
    key = jax.random.PRNGKey(0)
    kx, kp = jax.random.split(key)

    B, T, D, h_out = 2, 8, 32, 16
    x = jax.random.normal(kx, (B, T, D), jnp.float32)
    params = init_highway_params(kp, D, h_out, num_layers=2)
    ref = highway_reference(x, params)

    # Default path: bf16 weights, f32 accumulation (loose tolerance).
    out = jax.block_until_ready(highway_forward(x, params))
    assert out.shape == (B, T, h_out)
    assert jnp.allclose(out, ref, atol=1e-1, rtol=1e-1), "bf16 path mismatch"

    # Exact path: f32 weights, tight tolerance.
    out32 = jax.block_until_ready(highway_forward(x, params, weights_dtype=None))
    assert jnp.allclose(out32, ref, atol=1e-5, rtol=1e-5), "f32 path mismatch"

    # Deeper stack exercises the fori_loop-over-layers path (num_layers > 4).
    params5 = init_highway_params(kp, D, h_out, num_layers=5)
    out5 = jax.block_until_ready(highway_forward(x, params5, weights_dtype=None))
    ref5 = highway_reference(x, params5)
    assert jnp.allclose(out5, ref5, atol=1e-5, rtol=1e-5), "fori path mismatch"

    print("KERNEL_OK")
</pallas_src>

<mosaic_0001>
module attributes {stable_mosaic.version = 11 : i64} {
  func.func @highway_kernel(%arg0: i32, %arg1: memref<16x128xf32, #tpu.memory_space<vmem>>, %arg2: memref<2x128x256xbf16, #tpu.memory_space<vmem>>, %arg3: memref<2x1x256xf32, #tpu.memory_space<vmem>>, %arg4: memref<128x128xbf16, #tpu.memory_space<vmem>>, %arg5: memref<1x128xf32, #tpu.memory_space<vmem>>, %arg6: memref<16x128xf32, #tpu.memory_space<vmem>>) attributes {dimension_semantics = [#tpu.dimension_semantics<parallel>], iteration_bounds = array<i64: 1>, scalar_prefetch = 0 : i64, scratch_operands = 0 : i64, tpu.core_type = #tpu.core_type<tc>, window_params = [{transform_indices = @transform_0, window_bounds = array<i64: 16, 128>}, {pipeline_mode = #tpu.pipeline_mode<synchronous>, transform_indices = @transform_1, window_bounds = array<i64: 2, 128, 256>}, {pipeline_mode = #tpu.pipeline_mode<synchronous>, transform_indices = @transform_2, window_bounds = array<i64: 2, 1, 256>}, {pipeline_mode = #tpu.pipeline_mode<synchronous>, transform_indices = @transform_3, window_bounds = array<i64: 128, 128>}, {pipeline_mode = #tpu.pipeline_mode<synchronous>, transform_indices = @transform_4, window_bounds = array<i64: 1, 128>}, {transform_indices = @transform_5, window_bounds = array<i64: 16, 128>}]} {
    %c0 = arith.constant 0 : index
    %c0_0 = arith.constant 0 : index
    %0 = vector.load %arg1[%c0, %c0_0] : memref<16x128xf32, #tpu.memory_space<vmem>>, vector<16x128xf32>
    %1 = arith.truncf %0 : vector<16x128xf32> to vector<16x128xbf16>
    %c0_1 = arith.constant 0 : index
    %c0_2 = arith.constant 0 : index
    %c0_3 = arith.constant 0 : index
    %2 = vector.load %arg2[%c0_1, %c0_2, %c0_3] : memref<2x128x256xbf16, #tpu.memory_space<vmem>>, vector<1x128x256xbf16>
    %3 = vector.shape_cast %2 : vector<1x128x256xbf16> to vector<128x256xbf16>
    %cst = arith.constant dense<0.000000e+00> : vector<16x256xf32>
    %4 = tpu.matmul %1, %3, %cst {dimension_numbers = #tpu.dot_dimension_numbers<[1], [0], [0], [1], [0, 0, 1, 1], [], []>} : vector<16x128xbf16>, vector<128x256xbf16>, vector<16x256xf32> -> vector<16x256xf32>
    %c0_4 = arith.constant 0 : index
    %c0_5 = arith.constant 0 : index
    %c0_6 = arith.constant 0 : index
    %5 = vector.load %arg3[%c0_4, %c0_5, %c0_6] : memref<2x1x256xf32, #tpu.memory_space<vmem>>, vector<1x1x256xf32>
    %6 = vector.shape_cast %5 : vector<1x1x256xf32> to vector<1x256xf32>
    %7 = vector.broadcast %6 : vector<1x256xf32> to vector<16x256xf32>
    %8 = arith.addf %4, %7 : vector<16x256xf32>
    %9 = vector.extract_strided_slice %8 {offsets = [0, 0], sizes = [16, 128], strides = [1, 1]} : vector<16x256xf32> to vector<16x128xf32>
    %cst_7 = arith.constant 5.000000e-01 : f32
    %10 = vector.broadcast %cst_7 : f32 to vector<16x128xf32>
    %11 = arith.mulf %9, %10 : vector<16x128xf32>
    %cst_8 = arith.constant 1.41421354 : f32
    %12 = vector.broadcast %cst_8 : f32 to vector<16x128xf32>
    %13 = arith.divf %9, %12 : vector<16x128xf32>
    %14 = math.erf %13 : vector<16x128xf32>
    %cst_9 = arith.constant 1.000000e+00 : f32
    %15 = vector.broadcast %cst_9 : f32 to vector<16x128xf32>
    %16 = arith.addf %15, %14 : vector<16x128xf32>
    %17 = arith.mulf %11, %16 : vector<16x128xf32>
    %18 = vector.extract_strided_slice %8 {offsets = [0, 128], sizes = [16, 128], strides = [1, 1]} : vector<16x256xf32> to vector<16x128xf32>
    %19 = arith.negf %18 : vector<16x128xf32>
    %20 = math.exp %19 : vector<16x128xf32>
    %cst_10 = arith.constant 1.000000e+00 : f32
    %21 = vector.broadcast %cst_10 : f32 to vector<16x128xf32>
    %22 = arith.addf %21, %20 : vector<16x128xf32>
    %23 = arith.divf %21, %22 : vector<16x128xf32>
    %24 = arith.subf %17, %0 : vector<16x128xf32>
    %25 = arith.mulf %23, %24 : vector<16x128xf32>
    %26 = arith.addf %0, %25 : vector<16x128xf32>
    %27 = arith.truncf %26 : vector<16x128xf32> to vector<16x128xbf16>
    %c1 = arith.constant 1 : index
    %c0_11 = arith.constant 0 : index
    %c0_12 = arith.constant 0 : index
    %28 = vector.load %arg2[%c1, %c0_11, %c0_12] : memref<2x128x256xbf16, #tpu.memory_space<vmem>>, vector<1x128x256xbf16>
    %29 = vector.shape_cast %28 : vector<1x128x256xbf16> to vector<128x256xbf16>
    %cst_13 = arith.constant dense<0.000000e+00> : vector<16x256xf32>
    %30 = tpu.matmul %27, %29, %cst_13 {dimension_numbers = #tpu.dot_dimension_numbers<[1], [0], [0], [1], [0, 0, 1, 1], [], []>} : vector<16x128xbf16>, vector<128x256xbf16>, vector<16x256xf32> -> vector<16x256xf32>
    %c1_14 = arith.constant 1 : index
    %c0_15 = arith.constant 0 : index
    %c0_16 = arith.constant 0 : index
    %31 = vector.load %arg3[%c1_14, %c0_15, %c0_16] : memref<2x1x256xf32, #tpu.memory_space<vmem>>, vector<1x1x256xf32>
    %32 = vector.shape_cast %31 : vector<1x1x256xf32> to vector<1x256xf32>
    %33 = vector.broadcast %32 : vector<1x256xf32> to vector<16x256xf32>
    %34 = arith.addf %30, %33 : vector<16x256xf32>
    %35 = vector.extract_strided_slice %34 {offsets = [0, 0], sizes = [16, 128], strides = [1, 1]} : vector<16x256xf32> to vector<16x128xf32>
    %cst_17 = arith.constant 5.000000e-01 : f32
    %36 = vector.broadcast %cst_17 : f32 to vector<16x128xf32>
    %37 = arith.mulf %35, %36 : vector<16x128xf32>
    %cst_18 = arith.constant 1.41421354 : f32
    %38 = vector.broadcast %cst_18 : f32 to vector<16x128xf32>
    %39 = arith.divf %35, %38 : vector<16x128xf32>
    %40 = math.erf %39 : vector<16x128xf32>
    %cst_19 = arith.constant 1.000000e+00 : f32
    %41 = vector.broadcast %cst_19 : f32 to vector<16x128xf32>
    %42 = arith.addf %41, %40 : vector<16x128xf32>
    %43 = arith.mulf %37, %42 : vector<16x128xf32>
    %44 = vector.extract_strided_slice %34 {offsets = [0, 128], sizes = [16, 128], strides = [1, 1]} : vector<16x256xf32> to vector<16x128xf32>
    %45 = arith.negf %44 : vector<16x128xf32>
    %46 = math.exp %45 : vector<16x128xf32>
    %cst_20 = arith.constant 1.000000e+00 : f32
    %47 = vector.broadcast %cst_20 : f32 to vector<16x128xf32>
    %48 = arith.addf %47, %46 : vector<16x128xf32>
    %49 = arith.divf %47, %48 : vector<16x128xf32>
    %50 = arith.subf %43, %26 : vector<16x128xf32>
    %51 = arith.mulf %49, %50 : vector<16x128xf32>
    %52 = arith.addf %26, %51 : vector<16x128xf32>
    %53 = arith.truncf %52 : vector<16x128xf32> to vector<16x128xbf16>
    %c0_21 = arith.constant 0 : index
    %c0_22 = arith.constant 0 : index
    %54 = vector.load %arg4[%c0_21, %c0_22] : memref<128x128xbf16, #tpu.memory_space<vmem>>, vector<128x128xbf16>
    %cst_23 = arith.constant dense<0.000000e+00> : vector<16x128xf32>
    %55 = tpu.matmul %53, %54, %cst_23 {dimension_numbers = #tpu.dot_dimension_numbers<[1], [0], [0], [1], [0, 0, 1, 1], [], []>} : vector<16x128xbf16>, vector<128x128xbf16>, vector<16x128xf32> -> vector<16x128xf32>
    %c0_24 = arith.constant 0 : index
    %c0_25 = arith.constant 0 : index
    %56 = vector.load %arg5[%c0_24, %c0_25] : memref<1x128xf32, #tpu.memory_space<vmem>>, vector<1x128xf32>
    %57 = vector.broadcast %56 : vector<1x128xf32> to vector<16x128xf32>
    %58 = arith.addf %55, %57 : vector<16x128xf32>
    %c0_26 = arith.constant 0 : index
    %c0_27 = arith.constant 0 : index
    %59 = vector.load %arg6[%c0_26, %c0_27] : memref<16x128xf32, #tpu.memory_space<vmem>>, vector<16x128xf32>
    tpu.vector_store %arg6[%c0_26, %c0_27], %58 {strides = array<i32>} : memref<16x128xf32, #tpu.memory_space<vmem>>, vector<16x128xf32>,
    return
  }
  func.func @transform_0(%arg0: i32) -> (i32, i32) {
    %c0_i32 = arith.constant 0 : i32
    %c0_i32_0 = arith.constant 0 : i32
    return %arg0, %c0_i32 : i32, i32
  }
  func.func @transform_1(%arg0: i32) -> (i32, i32, i32) {
    %c0_i32 = arith.constant 0 : i32
    %c0_i32_0 = arith.constant 0 : i32
    %c0_i32_1 = arith.constant 0 : i32
    %c0_i32_2 = arith.constant 0 : i32
    return %c0_i32, %c0_i32_0, %c0_i32_1 : i32, i32, i32
  }
  func.func @transform_2(%arg0: i32) -> (i32, i32, i32) {
    %c0_i32 = arith.constant 0 : i32
    %c0_i32_0 = arith.constant 0 : i32
    %c0_i32_1 = arith.constant 0 : i32
    %c0_i32_2 = arith.constant 0 : i32
    return %c0_i32, %c0_i32_0, %c0_i32_1 : i32, i32, i32
  }
  func.func @transform_3(%arg0: i32) -> (i32, i32) {
    %c0_i32 = arith.constant 0 : i32
    %c0_i32_0 = arith.constant 0 : i32
    %c0_i32_1 = arith.constant 0 : i32
    return %c0_i32, %c0_i32_0 : i32, i32
  }
  func.func @transform_4(%arg0: i32) -> (i32, i32) {
    %c0_i32 = arith.constant 0 : i32
    %c0_i32_0 = arith.constant 0 : i32
    %c0_i32_1 = arith.constant 0 : i32
    return %c0_i32, %c0_i32_0 : i32, i32
  }
  func.func @transform_5(%arg0: i32) -> (i32, i32) {
    %c0_i32 = arith.constant 0 : i32
    %c0_i32_0 = arith.constant 0 : i32
    return %arg0, %c0_i32 : i32, i32
  }
}

module attributes {stable_mosaic.version = 11 : i64} {
  func.func @highway_kernel(%arg0: i32, %arg1: memref<16x128xf32, #tpu.memory_space<vmem>>, %arg2: memref<2x128x256xbf16, #tpu.memory_space<vmem>>, %arg3: memref<2x1x256xf32, #tpu.memory_space<vmem>>, %arg4: memref<128x128xbf16, #tpu.memory_space<vmem>>, %arg5: memref<1x128xf32, #tpu.memory_space<vmem>>, %arg6: memref<16x128xf32, #tpu.memory_space<vmem>>) attributes {dimension_semantics = [#tpu.dimension_semantics<parallel>], iteration_bounds = array<i64: 1>, scalar_prefetch = 0 : i64, scratch_operands = 0 : i64, tpu.core_type = #tpu.core_type<tc>, window_params = [{transform_indices = @transform_0, window_bounds = array<i64: 16, 128>}, {pipeline_mode = #tpu.pipeline_mode<synchronous>, transform_indices = @transform_1, window_bounds = array<i64: 2, 128, 256>}, {pipeline_mode = #tpu.pipeline_mode<synchronous>, transform_indices = @transform_2, window_bounds = array<i64: 2, 1, 256>}, {pipeline_mode = #tpu.pipeline_mode<synchronous>, transform_indices = @transform_3, window_bounds = array<i64: 128, 128>}, {pipeline_mode = #tpu.pipeline_mode<synchronous>, transform_indices = @transform_4, window_bounds = array<i64: 1, 128>}, {transform_indices = @transform_5, window_bounds = array<i64: 16, 128>}]} {
    %c0 = arith.constant 0 : index
    %c0_0 = arith.constant 0 : index
    %0 = vector.load %arg1[%c0, %c0_0] : memref<16x128xf32, #tpu.memory_space<vmem>>, vector<16x128xf32>
    %1 = arith.truncf %0 : vector<16x128xf32> to vector<16x128xbf16>
    %c0_1 = arith.constant 0 : index
    %c0_2 = arith.constant 0 : index
    %c0_3 = arith.constant 0 : index
    %2 = vector.load %arg2[%c0_1, %c0_2, %c0_3] : memref<2x128x256xbf16, #tpu.memory_space<vmem>>, vector<1x128x256xbf16>
    %3 = vector.shape_cast %2 : vector<1x128x256xbf16> to vector<128x256xbf16>
    %cst = arith.constant dense<0.000000e+00> : vector<16x256xf32>
    %4 = tpu.matmul %1, %3, %cst {dimension_numbers = #tpu.dot_dimension_numbers<[1], [0], [0], [1], [0, 0, 1, 1], [], []>} : vector<16x128xbf16>, vector<128x256xbf16>, vector<16x256xf32> -> vector<16x256xf32>
    %c0_4 = arith.constant 0 : index
    %c0_5 = arith.constant 0 : index
    %c0_6 = arith.constant 0 : index
    %5 = vector.load %arg3[%c0_4, %c0_5, %c0_6] : memref<2x1x256xf32, #tpu.memory_space<vmem>>, vector<1x1x256xf32>
    %6 = vector.shape_cast %5 : vector<1x1x256xf32> to vector<1x256xf32>
    %7 = vector.broadcast %6 : vector<1x256xf32> to vector<16x256xf32>
    %8 = arith.addf %4, %7 : vector<16x256xf32>
    %9 = vector.extract_strided_slice %8 {offsets = [0, 0], sizes = [16, 128], strides = [1, 1]} : vector<16x256xf32> to vector<16x128xf32>
    %cst_7 = arith.constant 5.000000e-01 : f32
    %10 = vector.broadcast %cst_7 : f32 to vector<16x128xf32>
    %11 = arith.mulf %9, %10 : vector<16x128xf32>
    %cst_8 = arith.constant 1.41421354 : f32
    %12 = vector.broadcast %cst_8 : f32 to vector<16x128xf32>
    %13 = arith.divf %9, %12 : vector<16x128xf32>
    %14 = math.erf %13 : vector<16x128xf32>
    %cst_9 = arith.constant 1.000000e+00 : f32
    %15 = vector.broadcast %cst_9 : f32 to vector<16x128xf32>
    %16 = arith.addf %15, %14 : vector<16x128xf32>
    %17 = arith.mulf %11, %16 : vector<16x128xf32>
    %18 = vector.extract_strided_slice %8 {offsets = [0, 128], sizes = [16, 128], strides = [1, 1]} : vector<16x256xf32> to vector<16x128xf32>
    %19 = arith.negf %18 : vector<16x128xf32>
    %20 = math.exp %19 : vector<16x128xf32>
    %cst_10 = arith.constant 1.000000e+00 : f32
    %21 = vector.broadcast %cst_10 : f32 to vector<16x128xf32>
    %22 = arith.addf %21, %20 : vector<16x128xf32>
    %23 = arith.divf %21, %22 : vector<16x128xf32>
    %24 = arith.subf %17, %0 : vector<16x128xf32>
    %25 = arith.mulf %23, %24 : vector<16x128xf32>
    %26 = arith.addf %0, %25 : vector<16x128xf32>
    %27 = arith.truncf %26 : vector<16x128xf32> to vector<16x128xbf16>
    %c1 = arith.constant 1 : index
    %c0_11 = arith.constant 0 : index
    %c0_12 = arith.constant 0 : index
    %28 = vector.load %arg2[%c1, %c0_11, %c0_12] : memref<2x128x256xbf16, #tpu.memory_space<vmem>>, vector<1x128x256xbf16>
    %29 = vector.shape_cast %28 : vector<1x128x256xbf16> to vector<128x256xbf16>
    %cst_13 = arith.constant dense<0.000000e+00> : vector<16x256xf32>
    %30 = tpu.matmul %27, %29, %cst_13 {dimension_numbers = #tpu.dot_dimension_numbers<[1], [0], [0], [1], [0, 0, 1, 1], [], []>} : vector<16x128xbf16>, vector<128x256xbf16>, vector<16x256xf32> -> vector<16x256xf32>
    %c1_14 = arith.constant 1 : index
    %c0_15 = arith.constant 0 : index
    %c0_16 = arith.constant 0 : index
    %31 = vector.load %arg3[%c1_14, %c0_15, %c0_16] : memref<2x1x256xf32, #tpu.memory_space<vmem>>, vector<1x1x256xf32>
    %32 = vector.shape_cast %31 : vector<1x1x256xf32> to vector<1x256xf32>
    %33 = vector.broadcast %32 : vector<1x256xf32> to vector<16x256xf32>
    %34 = arith.addf %30, %33 : vector<16x256xf32>
    %35 = vector.extract_strided_slice %34 {offsets = [0, 0], sizes = [16, 128], strides = [1, 1]} : vector<16x256xf32> to vector<16x128xf32>
    %cst_17 = arith.constant 5.000000e-01 : f32
    %36 = vector.broadcast %cst_17 : f32 to vector<16x128xf32>
    %37 = arith.mulf %35, %36 : vector<16x128xf32>
    %cst_18 = arith.constant 1.41421354 : f32
    %38 = vector.broadcast %cst_18 : f32 to vector<16x128xf32>
    %39 = arith.divf %35, %38 : vector<16x128xf32>
    %40 = math.erf %39 : vector<16x128xf32>
    %cst_19 = arith.constant 1.000000e+00 : f32
    %41 = vector.broadcast %cst_19 : f32 to vector<16x128xf32>
    %42 = arith.addf %41, %40 : vector<16x128xf32>
    %43 = arith.mulf %37, %42 : vector<16x128xf32>
    %44 = vector.extract_strided_slice %34 {offsets = [0, 128], sizes = [16, 128], strides = [1, 1]} : vector<16x256xf32> to vector<16x128xf32>
    %45 = arith.negf %44 : vector<16x128xf32>
    %46 = math.exp %45 : vector<16x128xf32>
    %cst_20 = arith.constant 1.000000e+00 : f32
    %47 = vector.broadcast %cst_20 : f32 to vector<16x128xf32>
    %48 = arith.addf %47, %46 : vector<16x128xf32>
    %49 = arith.divf %47, %48 : vector<16x128xf32>
    %50 = arith.subf %43, %26 : vector<16x128xf32>
    %51 = arith.mulf %49, %50 : vector<16x128xf32>
    %52 = arith.addf %26, %51 : vector<16x128xf32>
    %53 = arith.truncf %52 : vector<16x128xf32> to vector<16x128xbf16>
    %c0_21 = arith.constant 0 : index
    %c0_22 = arith.constant 0 : index
    %54 = vector.load %arg4[%c0_21, %c0_22] : memref<128x128xbf16, #tpu.memory_space<vmem>>, vector<128x128xbf16>
    %cst_23 = arith.constant dense<0.000000e+00> : vector<16x128xf32>
    %55 = tpu.matmul %53, %54, %cst_23 {dimension_numbers = #tpu.dot_dimension_numbers<[1], [0], [0], [1], [0, 0, 1, 1], [], []>} : vector<16x128xbf16>, vector<128x128xbf16>, vector<16x128xf32> -> vector<16x128xf32>
    %c0_24 = arith.constant 0 : index
    %c0_25 = arith.constant 0 : index
    %56 = vector.load %arg5[%c0_24, %c0_25] : memref<1x128xf32, #tpu.memory_space<vmem>>, vector<1x128xf32>
    %57 = vector.broadcast %56 : vector<1x128xf32> to vector<16x128xf32>
    %58 = arith.addf %55, %57 : vector<16x128xf32>
    %c0_26 = arith.constant 0 : index
    %c0_27 = arith.constant 0 : index
    %59 = vector.load %arg6[%c0_26, %c0_27] : memref<16x128xf32, #tpu.memory_space<vmem>>, vector<16x128xf32>
    tpu.vector_store %arg6[%c0_26, %c0_27], %58 {strides = array<i32>} : memref<16x128xf32, #tpu.memory_space<vmem>>, vector<16x128xf32>,
    return
  }
  func.func @transform_0(%arg0: i32) -> (i32, i32) {
    %c0_i32 = arith.constant 0 : i32
    %c0_i32_0 = arith.constant 0 : i32
    return %arg0, %c0_i32 : i32, i32
  }
  func.func @transform_1(%arg0: i32) -> (i32, i32, i32) {
    %c0_i32 = arith.constant 0 : i32
    %c0_i32_0 = arith.constant 0 : i32
    %c0_i32_1 = arith.constant 0 : i32
    %c0_i32_2 = arith.constant 0 : i32
    return %c0_i32, %c0_i32_0, %c0_i32_1 : i32, i32, i32
  }
  func.func @transform_2(%arg0: i32) -> (i32, i32, i32) {
    %c0_i32 = arith.constant 0 : i32
    %c0_i32_0 = arith.constant 0 : i32
    %c0_i32_1 = arith.constant 0 : i32
    %c0_i32_2 = arith.constant 0 : i32
    return %c0_i32, %c0_i32_0, %c0_i32_1 : i32, i32, i32
  }
  func.func @transform_3(%arg0: i32) -> (i32, i32) {
    %c0_i32 = arith.constant 0 : i32
    %c0_i32_0 = arith.constant 0 : i32
    %c0_i32_1 = arith.constant 0 : i32
    return %c0_i32, %c0_i32_0 : i32, i32
  }
  func.func @transform_4(%arg0: i32) -> (i32, i32) {
    %c0_i32 = arith.constant 0 : i32
    %c0_i32_0 = arith.constant 0 : i32
    %c0_i32_1 = arith.constant 0 : i32
    return %c0_i32, %c0_i32_0 : i32, i32
  }
  func.func @transform_5(%arg0: i32) -> (i32, i32) {
    %c0_i32 = arith.constant 0 : i32
    %c0_i32_0 = arith.constant 0 : i32
    return %arg0, %c0_i32 : i32, i32
  }
}

</mosaic_0001>

<llo_original>
// kernel: tpu_custom_call.1
$region0: #{tpu_custom_call.1}
  #allocation0 [shape = 'u32[]', space=smem, size = 0x4, offset = 0x4, fixed_abs, tag = 'smem constant byte address 0x4 - core index']
  #allocation1 [shape = 'u32[144,128]{1,0:T(1,128)}', space=vmem, size = 0x12000, scoped, tag = 'internal scratch']
  %s0 = inlined_call_operand.hbm [shape: f32[16,128], index: 0, kind: input, shape index: {}]
  %s1 = inlined_call_operand.hbm [shape: bf16[2,128,256], index: 1, kind: input, shape index: {}]
  %s2 = inlined_call_operand.hbm [shape: f32[2,1,256], index: 2, kind: input, shape index: {}]
  %s3 = inlined_call_operand.hbm [shape: bf16[128,128], index: 3, kind: input, shape index: {}]
  %s4 = inlined_call_operand.vmem [shape: f32[1,128], index: 4, kind: input, shape index: {}]
  %s5 = inlined_call_operand.hbm [shape: f32[16,128], index: 5, kind: output, shape index: {}]
  %s6 = sld [smem:[#allocation0]]
  $region46: #{tpu_custom_call.1} parent=0
    _
  %s8 = ssub.s32 1, %s6
  %s9 = scalar_select 0, %s8, %s6
  $region1: #{tpu_custom_call.1} parent=0
    #allocation2 [shape = 'u8[8192]{0}', space=vmem, size = 0x2000, scoped, tag = 'input window, operand 0, single buffered']
    #allocation3 [shape = 's32[1]{0}', space=sflag, size = 0x4, scoped, tag = 'scoped memory for tpu_custom_call.1']
    #allocation4 [shape = 's32[1]{0}', space=sflag, size = 0x4, scoped, tag = 'scoped memory for tpu_custom_call.1']
    #allocation5 [shape = 'u8[131072]{0}', space=vmem, size = 0x20000, scoped, tag = 'input window, operand 1, single buffered']
    #allocation6 [shape = 's32[1]{0}', space=sflag, size = 0x4, scoped, tag = 'scoped memory for tpu_custom_call.1']
    #allocation7 [shape = 'u8[2048]{0}', space=vmem, size = 0x800, scoped, tag = 'input window, operand 2, single buffered']
    #allocation8 [shape = 'u8[32768]{0}', space=vmem, size = 0x8000, scoped, tag = 'input window, operand 3, single buffered']
    #allocation9 [shape = 's32[1]{0}', space=sflag, size = 0x4, scoped, tag = 'scoped memory for tpu_custom_call.1']
    #allocation10 [shape = 'u8[8192]{0}', space=vmem, size = 0x2000, scoped, tag = 'output window, operand 0, single buffered']
    %10 = vsyncpa [#allocation3], 0
    %11 = vsyncpa [#allocation6], 0
    %12 = vsyncpa [#allocation9], 0
    %13 = vsyncpa [#allocation4], 0
    // Predicated region
    $region2: #{tpu_custom_call.1} parent=1 // pred_check
      _
    $region3: #{tpu_custom_call.1} parent=1 // pred_check_branch
      %15 = sbr.rel (0) target = $region5
    $region4: #{tpu_custom_call.1} parent=1 // pred_region
      %s17 = ssub.s32 256, 256
      %18 = vsyncadd [#allocation3], %s17
      %s19 = sshll.u32 [#allocation2], 4
      %s20 = int_to_ptr.vmem [resolvable:$true] %s19
      %25 = dma.hbm_to_vmem [thread:$0]  %s0, 256, %s20, [#allocation3], 128, 128, 8
    $region5: #{tpu_custom_call.1} parent=1 // pred_fallthru
      _
    // Predicated region
    $region6: #{tpu_custom_call.1} parent=1 // pred_check
      _
    $region7: #{tpu_custom_call.1} parent=1 // pred_check_branch
      %27 = sbr.rel (0) target = $region9
    $region8: #{tpu_custom_call.1} parent=1 // pred_region
      %s29 = ssub.s32 4096, 4096
      %30 = vsyncadd [#allocation6], %s29
      %s31 = sshll.u32 [#allocation5], 4
      %s32 = int_to_ptr.vmem [resolvable:$true] %s31
      %37 = dma.hbm_to_vmem [thread:$0]  %s1, 4096, %s32, [#allocation6], 128, 128, 8
    $region9: #{tpu_custom_call.1} parent=1 // pred_fallthru
      _
    // Predicated region
    $region10: #{tpu_custom_call.1} parent=1 // pred_check
      _
    $region11: #{tpu_custom_call.1} parent=1 // pred_check_branch
      %39 = sbr.rel (0) target = $region13
    $region12: #{tpu_custom_call.1} parent=1 // pred_region
      %s41 = ssub.s32 64, 64
      %42 = vsyncadd [#allocation6], %s41
      %s43 = sshll.u32 [#allocation7], 4
      %s44 = int_to_ptr.vmem [resolvable:$true] %s43
      %49 = dma.hbm_to_vmem [thread:$0]  %s2, 64, %s44, [#allocation6], 32, 32, 2
    $region13: #{tpu_custom_call.1} parent=1 // pred_fallthru
      _
    // Predicated region
    $region14: #{tpu_custom_call.1} parent=1 // pred_check
      _
    $region15: #{tpu_custom_call.1} parent=1 // pred_check_branch
      %51 = sbr.rel (0) target = $region17
    $region16: #{tpu_custom_call.1} parent=1 // pred_region
      %s53 = ssub.s32 1024, 1024
      %54 = vsyncadd [#allocation9], %s53
      %s55 = sshll.u32 [#allocation8], 4
      %s56 = int_to_ptr.vmem [resolvable:$true] %s55
      %61 = dma.hbm_to_vmem [thread:$0]  %s3, 1024, %s56, [#allocation9], 64, 64, 4
    $region17: #{tpu_custom_call.1} parent=1 // pred_fallthru
      _
    // Predicated region
    $region18: #{tpu_custom_call.1} parent=1 // pred_check
      _
    $region19: #{tpu_custom_call.1} parent=1 // pred_check_branch
      %63 = sbr.rel (0) target = $region21
    $region20: #{tpu_custom_call.1} parent=1 // pred_region
      _
    $region21: #{tpu_custom_call.1} parent=1 // pred_fallthru
      _
    // Predicated region
    $region22: #{tpu_custom_call.1} parent=1 // pred_check
      _
    $region23: #{tpu_custom_call.1} parent=1 // pred_check_branch
      %65 = sbr.rel (0) target = $region25
    $region24: #{tpu_custom_call.1} parent=1 // pred_region
      %66 = dma.done [#allocation3], 256
    $region25: #{tpu_custom_call.1} parent=1 // pred_fallthru
      _
    // Predicated region
    $region26: #{tpu_custom_call.1} parent=1 // pred_check
      _
    $region27: #{tpu_custom_call.1} parent=1 // pred_check_branch
      %68 = sbr.rel (0) target = $region29
    $region28: #{tpu_custom_call.1} parent=1 // pred_region
      %69 = dma.done [#allocation6], 4096
    $region29: #{tpu_custom_call.1} parent=1 // pred_fallthru
      _
    // Predicated region
    $region30: #{tpu_custom_call.1} parent=1 // pred_check
      _
    $region31: #{tpu_custom_call.1} parent=1 // pred_check_branch
      %71 = sbr.rel (0) target = $region33
    $region32: #{tpu_custom_call.1} parent=1 // pred_region
      %72 = dma.done [#allocation6], 64
    $region33: #{tpu_custom_call.1} parent=1 // pred_fallthru
      _
    // Predicated region
    $region34: #{tpu_custom_call.1} parent=1 // pred_check
      _
    $region35: #{tpu_custom_call.1} parent=1 // pred_check_branch
      %74 = sbr.rel (0) target = $region37
    $region36: #{tpu_custom_call.1} parent=1 // pred_region
      %75 = dma.done [#allocation9], 1024
    $region37: #{tpu_custom_call.1} parent=1 // pred_fallthru
      _
    %v77 = vld [vmem:[#allocation2] sm:$0xff]
    %v78 = vld [vmem:[#allocation2 + $0x8] sm:$0xff]
    %v79 = vpack.c.bf16 %v78, %v77
    %v80 = vld [vmem:[#allocation5] sm:$0xff]
    %v81 = vld [vmem:[#allocation5 + $0x8] sm:$0xff]
    %v82 = vld [vmem:[#allocation5 + $0x10] sm:$0xff]
    %v83 = vld [vmem:[#allocation5 + $0x18] sm:$0xff]
    %v84 = vld [vmem:[#allocation5 + $0x20] sm:$0xff]
    %v85 = vld [vmem:[#allocation5 + $0x28] sm:$0xff]
    %v86 = vld [vmem:[#allocation5 + $0x30] sm:$0xff]
    %v87 = vld [vmem:[#allocation5 + $0x38] sm:$0xff]
    %v88 = vld [vmem:[#allocation5 + $0x40] sm:$0xff]
    %v89 = vld [vmem:[#allocation5 + $0x48] sm:$0xff]
    %v90 = vld [vmem:[#allocation5 + $0x50] sm:$0xff]
    %v91 = vld [vmem:[#allocation5 + $0x58] sm:$0xff]
    %v92 = vld [vmem:[#allocation5 + $0x60] sm:$0xff]
    %v93 = vld [vmem:[#allocation5 + $0x68] sm:$0xff]
    %v94 = vld [vmem:[#allocation5 + $0x70] sm:$0xff]
    %v95 = vld [vmem:[#allocation5 + $0x78] sm:$0xff]
    %v96 = vld [vmem:[#allocation7] sm:$0x3]
    %v98 = vlaneseq
    %v99 = vshrl.u32 %v98, 7
    %v100 = vsub.s32 0, %v99
    %v101 = vrot.slane %v96, %v100
    %v102 = vlaneseq
    %v103 = vshrl.u32 %v102, 7
    %v104 = vsub.s32 1, %v103
    %v105 = vrot.slane %v96, %v104
    %v124 = vunpack.c.l.b16 %v80
    %v125 = vunpack.c.h.b16 %v80
    %v126 = vunpack.c.l.b16 %v81
    %v127 = vunpack.c.h.b16 %v81
    %v128 = vunpack.c.l.b16 %v82
    %v129 = vunpack.c.h.b16 %v82
    %v130 = vunpack.c.l.b16 %v83
    %v131 = vunpack.c.h.b16 %v83
    %v132 = vunpack.c.l.b16 %v84
    %v133 = vunpack.c.h.b16 %v84
    %v134 = vunpack.c.l.b16 %v85
    %v135 = vunpack.c.h.b16 %v85
    %v136 = vunpack.c.l.b16 %v86
    %v137 = vunpack.c.h.b16 %v86
    %v138 = vunpack.c.l.b16 %v87
    %v139 = vunpack.c.h.b16 %v87
    %v140 = vunpack.c.l.b16 %v88
    %v141 = vunpack.c.h.b16 %v88
    %v142 = vunpack.c.l.b16 %v89
    %v143 = vunpack.c.h.b16 %v89
    %v144 = vunpack.c.l.b16 %v90
    %v145 = vunpack.c.h.b16 %v90
    %v146 = vunpack.c.l.b16 %v91
    %v147 = vunpack.c.h.b16 %v91
    %v148 = vunpack.c.l.b16 %v92
    %v149 = vunpack.c.h.b16 %v92
    %v150 = vunpack.c.l.b16 %v93
    %v151 = vunpack.c.h.b16 %v93
    %v152 = vunpack.c.l.b16 %v94
    %v153 = vunpack.c.h.b16 %v94
    %v154 = vunpack.c.l.b16 %v95
    %v155 = vunpack.c.h.b16 %v95
    %v156 = vpack.c.b16 %v126, %v124
    %v157 = vpack.c.b16 %v127, %v125
    %v158 = vpack.c.b16 %v130, %v128
    %v159 = vpack.c.b16 %v131, %v129
    %v160 = vpack.c.b16 %v134, %v132
    %v161 = vpack.c.b16 %v135, %v133
    %v162 = vpack.c.b16 %v138, %v136
    %v163 = vpack.c.b16 %v139, %v137
    %v164 = vpack.c.b16 %v142, %v140
    %v165 = vpack.c.b16 %v143, %v141
    %v166 = vpack.c.b16 %v146, %v144
    %v167 = vpack.c.b16 %v147, %v145
    %v168 = vpack.c.b16 %v150, %v148
    %v169 = vpack.c.b16 %v151, %v149
    %v170 = vpack.c.b16 %v154, %v152
    %v171 = vpack.c.b16 %v155, %v153
    %188 = vmatprep.subr.bf16.mxu0 %v171
    %189 = vmatpush1.bf16.msra.mxu0 %v170
    %190 = vmatprep.subr.bf16.mxu0 %v169
    %191 = vmatpush1.bf16.msra.mxu0 %v168
    %192 = vmatprep.subr.bf16.mxu0 %v167
    %193 = vmatpush1.bf16.msra.mxu0 %v166
    %194 = vmatprep.subr.bf16.mxu0 %v165
    %195 = vmatpush1.bf16.msra.mxu0 %v164
    %196 = vmatprep.subr.bf16.mxu0 %v163
    %197 = vmatpush1.bf16.msra.mxu0 %v162
    %198 = vmatprep.subr.bf16.mxu0 %v161
    %199 = vmatpush1.bf16.msra.mxu0 %v160
    %200 = vmatprep.subr.bf16.mxu0 %v159
    %201 = vmatpush1.bf16.msra.mxu0 %v158
    %202 = vmatprep.subr.bf16.mxu0 %v157
    %203 = vmatpush1.bf16.msra.mxu0 %v156
    %204 = vmatprep.subr.bf16.mxu0 0
    %205 = vmatpush2.bf16.msra.mxu0 0
    %206 = vmatprep.subr.bf16.mxu0 0
    %207 = vmatpush2.bf16.msra.mxu0 0
    %208 = vmatprep.subr.bf16.mxu0 0
    %209 = vmatpush2.bf16.msra.mxu0 0
    %210 = vmatprep.subr.bf16.mxu0 0
    %211 = vmatpush2.bf16.msra.mxu0 0
    %212 = vmatprep.subr.bf16.mxu0 0
    %213 = vmatpush2.bf16.msra.mxu0 0
    %214 = vmatprep.subr.bf16.mxu0 0
    %215 = vmatpush2.bf16.msra.mxu0 0
    %216 = vmatprep.subr.bf16.mxu0 0
    %217 = vmatpush2.bf16.msra.mxu0 0
    %218 = vmatprep.subr.bf16.mxu0 0
    %219 = vmatpush2.bf16.msra.mxu0 0
    %220 = vmatprep.mubr.bf16.mxu0 0
    %221 = vmatmul.mubr.bf16.gmra.mxu0 %v79
    %v222 = vpop.f32.mrf.mxu0
    %v223 = vadd.f32 %v101, %v222
    %v224 = vpop.f32.mrf.mxu0
    %v225 = vadd.f32 %v105, %v224
    %v226 = vpop.f32.mrf.mxu0
    %v227 = vadd.f32 %v101, %v226
    %v228 = vpop.f32.mrf.mxu0
    %v229 = vadd.f32 %v105, %v228
    %230 = vdwg.mxu0
    %v231 = vmul.f32 %v223, 0.5
    %v232 = vmul.f32 %v227, 0.5
    %v233 = vrcp.pop 1.4142135
    %v234 = vmul.f32 %v223, %v233
    %v235 = vmul.f32 %v227, %v233
    %v236 = verf.f32.pop %v234
    %v237 = verf.f32.pop %v235
    %v238 = vadd.f32 %v236, 1.0
    %v239 = vadd.f32 %v237, 1.0
    %v240 = vmul.f32 %v231, %v238
    %v241 = vmul.f32 %v232, %v239
    %v242 = vxor.u32 %v225, 2147483648
    %v243 = vxor.u32 %v229, 2147483648
    %v244 = vmul.f32 %v242, 1.442695
    %v245 = vpow.pop %v244
    %v246 = vmul.f32 %v243, 1.442695
    %v247 = vpow.pop %v246
    %v248 = vadd.f32 %v245, 1.0
    %v249 = vadd.f32 %v247, 1.0
    %v250 = vrcp.pop %v248
    %v251 = vmul.f32 1.0, %v250
    %v252 = vrcp.pop %v249
    %v253 = vmul.f32 1.0, %v252
    %v254 = vsub.f32 %v240, %v77
    %v255 = vsub.f32 %v241, %v78
    %v256 = vmul.f32 %v251, %v254
    %v257 = vmul.f32 %v253, %v255
    %v258 = vadd.f32 %v77, %v256
    %v259 = vadd.f32 %v78, %v257
    %v260 = vpack.c.bf16 %v259, %v258
    %s261 = scalar_lea.vmem [#allocation5], 128
    %v262 = vld [vmem:[%s261] sm:$0xff]
    %v263 = vld [vmem:[%s261 + $0x8] sm:$0xff]
    %v264 = vld [vmem:[%s261 + $0x10] sm:$0xff]
    %v265 = vld [vmem:[%s261 + $0x18] sm:$0xff]
    %v266 = vld [vmem:[%s261 + $0x20] sm:$0xff]
    %v267 = vld [vmem:[%s261 + $0x28] sm:$0xff]
    %v268 = vld [vmem:[%s261 + $0x30] sm:$0xff]
    %v269 = vld [vmem:[%s261 + $0x38] sm:$0xff]
    %v270 = vld [vmem:[%s261 + $0x40] sm:$0xff]
    %v271 = vld [vmem:[%s261 + $0x48] sm:$0xff]
    %v272 = vld [vmem:[%s261 + $0x50] sm:$0xff]
    %v273 = vld [vmem:[%s261 + $0x58] sm:$0xff]
    %v274 = vld [vmem:[%s261 + $0x60] sm:$0xff]
    %v275 = vld [vmem:[%s261 + $0x68] sm:$0xff]
    %v276 = vld [vmem:[%s261 + $0x70] sm:$0xff]
    %v277 = vld [vmem:[%s261 + $0x78] sm:$0xff]
    %s278 = scalar_lea.vmem [#allocation7], 2
    %v279 = vld [vmem:[%s278] sm:$0x3]
    %v281 = vlaneseq
    %v282 = vshrl.u32 %v281, 7
    %v283 = vsub.s32 0, %v282
    %v284 = vrot.slane %v279, %v283
    %v285 = vlaneseq
    %v286 = vshrl.u32 %v285, 7
    %v287 = vsub.s32 1, %v286
    %v288 = vrot.slane %v279, %v287
    %v307 = vunpack.c.l.b16 %v262
    %v308 = vunpack.c.h.b16 %v262
    %v309 = vunpack.c.l.b16 %v263
    %v310 = vunpack.c.h.b16 %v263
    %v311 = vunpack.c.l.b16 %v264
    %v312 = vunpack.c.h.b16 %v264
    %v313 = vunpack.c.l.b16 %v265
    %v314 = vunpack.c.h.b16 %v265
    %v315 = vunpack.c.l.b16 %v266
    %v316 = vunpack.c.h.b16 %v266
    %v317 = vunpack.c.l.b16 %v267
    %v318 = vunpack.c.h.b16 %v267
    %v319 = vunpack.c.l.b16 %v268
    %v320 = vunpack.c.h.b16 %v268
    %v321 = vunpack.c.l.b16 %v269
    %v322 = vunpack.c.h.b16 %v269
    %v323 = vunpack.c.l.b16 %v270
    %v324 = vunpack.c.h.b16 %v270
    %v325 = vunpack.c.l.b16 %v271
    %v326 = vunpack.c.h.b16 %v271
    %v327 = vunpack.c.l.b16 %v272
    %v328 = vunpack.c.h.b16 %v272
    %v329 = vunpack.c.l.b16 %v273
    %v330 = vunpack.c.h.b16 %v273
    %v331 = vunpack.c.l.b16 %v274
    %v332 = vunpack.c.h.b16 %v274
    %v333 = vunpack.c.l.b16 %v275
    %v334 = vunpack.c.h.b16 %v275
    %v335 = vunpack.c.l.b16 %v276
    %v336 = vunpack.c.h.b16 %v276
    %v337 = vunpack.c.l.b16 %v277
    %v338 = vunpack.c.h.b16 %v277
    %v339 = vpack.c.b16 %v309, %v307
    %v340 = vpack.c.b16 %v310, %v308
    %v341 = vpack.c.b16 %v313, %v311
    %v342 = vpack.c.b16 %v314, %v312
    %v343 = vpack.c.b16 %v317, %v315
    %v344 = vpack.c.b16 %v318, %v316
    %v345 = vpack.c.b16 %v321, %v319
    %v346 = vpack.c.b16 %v322, %v320
    %v347 = vpack.c.b16 %v325, %v323
    %v348 = vpack.c.b16 %v326, %v324
    %v349 = vpack.c.b16 %v329, %v327
    %v350 = vpack.c.b16 %v330, %v328
    %v351 = vpack.c.b16 %v333, %v331
    %v352 = vpack.c.b16 %v334, %v332
    %v353 = vpack.c.b16 %v337, %v335
    %v354 = vpack.c.b16 %v338, %v336
    %371 = vmatprep.subr.bf16.mxu0 %v354
    %372 = vmatpush1.bf16.msra.mxu0 %v353
    %373 = vmatprep.subr.bf16.mxu0 %v352
    %374 = vmatpush1.bf16.msra.mxu0 %v351
    %375 = vmatprep.subr.bf16.mxu0 %v350
    %376 = vmatpush1.bf16.msra.mxu0 %v349
    %377 = vmatprep.subr.bf16.mxu0 %v348
    %378 = vmatpush1.bf16.msra.mxu0 %v347
    %379 = vmatprep.subr.bf16.mxu0 %v346
    %380 = vmatpush1.bf16.msra.mxu0 %v345
    %381 = vmatprep.subr.bf16.mxu0 %v344
    %382 = vmatpush1.bf16.msra.mxu0 %v343
    %383 = vmatprep.subr.bf16.mxu0 %v342
    %384 = vmatpush1.bf16.msra.mxu0 %v341
    %385 = vmatprep.subr.bf16.mxu0 %v340
    %386 = vmatpush1.bf16.msra.mxu0 %v339
    %387 = vmatprep.subr.bf16.mxu0 0
    %388 = vmatpush2.bf16.msra.mxu0 0
    %389 = vmatprep.subr.bf16.mxu0 0
    %390 = vmatpush2.bf16.msra.mxu0 0
    %391 = vmatprep.subr.bf16.mxu0 0
    %392 = vmatpush2.bf16.msra.mxu0 0
    %393 = vmatprep.subr.bf16.mxu0 0
    %394 = vmatpush2.bf16.msra.mxu0 0
    %395 = vmatprep.subr.bf16.mxu0 0
    %396 = vmatpush2.bf16.msra.mxu0 0
    %397 = vmatprep.subr.bf16.mxu0 0
    %398 = vmatpush2.bf16.msra.mxu0 0
    %399 = vmatprep.subr.bf16.mxu0 0
    %400 = vmatpush2.bf16.msra.mxu0 0
    %401 = vmatprep.subr.bf16.mxu0 0
    %402 = vmatpush2.bf16.msra.mxu0 0
    %403 = vmatprep.mubr.bf16.mxu0 0
    %404 = vmatmul.mubr.bf16.gmra.mxu0 %v260
    %v405 = vpop.f32.mrf.mxu0
    %v406 = vadd.f32 %v284, %v405
    %v407 = vpop.f32.mrf.mxu0
    %v408 = vadd.f32 %v288, %v407
    %v409 = vpop.f32.mrf.mxu0
    %v410 = vadd.f32 %v284, %v409
    %v411 = vpop.f32.mrf.mxu0
    %v412 = vadd.f32 %v288, %v411
    %413 = vdwg.mxu0
    %v414 = vmul.f32 %v406, 0.5
    %v415 = vmul.f32 %v410, 0.5
    %v416 = vmul.f32 %v406, %v233
    %v417 = vmul.f32 %v410, %v233
    %v418 = verf.f32.pop %v416
    %v419 = verf.f32.pop %v417
    %v420 = vadd.f32 %v418, 1.0
    %v421 = vadd.f32 %v419, 1.0
    %v422 = vmul.f32 %v414, %v420
    %v423 = vmul.f32 %v415, %v421
    %v424 = vxor.u32 %v408, 2147483648
    %v425 = vxor.u32 %v412, 2147483648
    %v426 = vmul.f32 %v424, 1.442695
    %v427 = vpow.pop %v426
    %v428 = vmul.f32 %v425, 1.442695
    %v429 = vpow.pop %v428
    %v430 = vadd.f32 %v427, 1.0
    %v431 = vadd.f32 %v429, 1.0
    %v432 = vrcp.pop %v430
    %v433 = vmul.f32 1.0, %v432
    %v434 = vrcp.pop %v431
    %v435 = vmul.f32 1.0, %v434
    %v436 = vsub.f32 %v422, %v258
    %v437 = vsub.f32 %v423, %v259
    %v438 = vmul.f32 %v433, %v436
    %v439 = vmul.f32 %v435, %v437
    %v440 = vadd.f32 %v258, %v438
    %v441 = vadd.f32 %v259, %v439
    %v442 = vpack.c.bf16 %v441, %v440
    %v443 = vld [vmem:[#allocation8] sm:$0xf]
    %v444 = vld [vmem:[#allocation8 + $0x4] sm:$0xf]
    %v445 = vld [vmem:[#allocation8 + $0x8] sm:$0xf]
    %v446 = vld [vmem:[#allocation8 + $0xc] sm:$0xf]
    %v447 = vld [vmem:[#allocation8 + $0x10] sm:$0xf]
    %v448 = vld [vmem:[#allocation8 + $0x14] sm:$0xf]
    %v449 = vld [vmem:[#allocation8 + $0x18] sm:$0xf]
    %v450 = vld [vmem:[#allocation8 + $0x1c] sm:$0xf]
    %v451 = vld [vmem:[#allocation8 + $0x20] sm:$0xf]
    %v452 = vld [vmem:[#allocation8 + $0x24] sm:$0xf]
    %v453 = vld [vmem:[#allocation8 + $0x28] sm:$0xf]
    %v454 = vld [vmem:[#allocation8 + $0x2c] sm:$0xf]
    %v455 = vld [vmem:[#allocation8 + $0x30] sm:$0xf]
    %v456 = vld [vmem:[#allocation8 + $0x34] sm:$0xf]
    %v457 = vld [vmem:[#allocation8 + $0x38] sm:$0xf]
    %v458 = vld [vmem:[#allocation8 + $0x3c] sm:$0xf]
    %v459 = vld [vmem:[%s4] sm:$0x1]
    %v461 = vlaneseq
    %v462 = vshrl.u32 %v461, 7
    %v463 = vsub.s32 0, %v462
    %v464 = vrot.slane %v459, %v463
    %v482 = vunpack.c.l.b16 %v443
    %v483 = vunpack.c.l.b16 %v444
    %v484 = vunpack.c.l.b16 %v445
    %v485 = vunpack.c.l.b16 %v446
    %v486 = vunpack.c.l.b16 %v447
    %v487 = vunpack.c.l.b16 %v448
    %v488 = vunpack.c.l.b16 %v449
    %v489 = vunpack.c.l.b16 %v450
    %v490 = vunpack.c.l.b16 %v451
    %v491 = vunpack.c.l.b16 %v452
    %v492 = vunpack.c.l.b16 %v453
    %v493 = vunpack.c.l.b16 %v454
    %v494 = vunpack.c.l.b16 %v455
    %v495 = vunpack.c.l.b16 %v456
    %v496 = vunpack.c.l.b16 %v457
    %v497 = vunpack.c.l.b16 %v458
    %v498 = vpack.c.b16 %v483, %v482
    %v499 = vpack.c.b16 %v485, %v484
    %v500 = vpack.c.b16 %v487, %v486
    %v501 = vpack.c.b16 %v489, %v488
    %v502 = vpack.c.b16 %v491, %v490
    %v503 = vpack.c.b16 %v493, %v492
    %v504 = vpack.c.b16 %v495, %v494
    %v505 = vpack.c.b16 %v497, %v496
    %514 = vmatprep.subr.bf16.mxu0 0
    %515 = vmatpush1.bf16.msra.mxu0 %v505
    %516 = vmatprep.subr.bf16.mxu0 0
    %517 = vmatpush1.bf16.msra.mxu0 %v504
    %518 = vmatprep.subr.bf16.mxu0 0
    %519 = vmatpush1.bf16.msra.mxu0 %v503
    %520 = vmatprep.subr.bf16.mxu0 0
    %521 = vmatpush1.bf16.msra.mxu0 %v502
    %522 = vmatprep.subr.bf16.mxu0 0
    %523 = vmatpush1.bf16.msra.mxu0 %v501
    %524 = vmatprep.subr.bf16.mxu0 0
    %525 = vmatpush1.bf16.msra.mxu0 %v500
    %526 = vmatprep.subr.bf16.mxu0 0
    %527 = vmatpush1.bf16.msra.mxu0 %v499
    %528 = vmatprep.subr.bf16.mxu0 0
    %529 = vmatpush1.bf16.msra.mxu0 %v498
    %530 = vmatprep.subr.bf16.mxu0 0
    %531 = vmatpush2.bf16.msra.mxu0 0
    %532 = vmatprep.subr.bf16.mxu0 0
    %533 = vmatpush2.bf16.msra.mxu0 0
    %534 = vmatprep.subr.bf16.mxu0 0
    %535 = vmatpush2.bf16.msra.mxu0 0
    %536 = vmatprep.subr.bf16.mxu0 0
    %537 = vmatpush2.bf16.msra.mxu0 0
    %538 = vmatprep.subr.bf16.mxu0 0
    %539 = vmatpush2.bf16.msra.mxu0 0
    %540 = vmatprep.subr.bf16.mxu0 0
    %541 = vmatpush2.bf16.msra.mxu0 0
    %542 = vmatprep.subr.bf16.mxu0 0
    %543 = vmatpush2.bf16.msra.mxu0 0
    %544 = vmatprep.subr.bf16.mxu0 0
    %545 = vmatpush2.bf16.msra.mxu0 0
    %546 = vmatprep.mubr.bf16.mxu0 0
    %547 = vmatmul.mubr.bf16.gmra.mxu0 %v442
    %v548 = vpop.f32.mrf.mxu0
    %v549 = vadd.f32 %v464, %v548
    %v550 = vpop.f32.mrf.mxu0
    %v551 = vpop.f32.mrf.mxu0
    %v552 = vadd.f32 %v464, %v551
    %v553 = vpop.f32.mrf.mxu0
    %554 = vdwg.mxu0
    %555 = vst [vmem:[#allocation10] sm:$0xff] %v549
    %556 = vst [vmem:[#allocation10 + $0x8] sm:$0xff] %v552
    // Predicated region
    $region38: #{tpu_custom_call.1} parent=1 // pred_check
      _
    $region39: #{tpu_custom_call.1} parent=1 // pred_check_branch
      %558 = sbr.rel (0) target = $region41
    $region40: #{tpu_custom_call.1} parent=1 // pred_region
      %s560 = ssub.s32 256, 256
      %561 = vsyncadd [#allocation4], %s560
      %s562 = sshll.u32 [#allocation10], 4
      %s563 = int_to_ptr.vmem [resolvable:$true] %s562
      %568 = dma.vmem_to_hbm [thread:$0]  %s563, 256, %s5, [#allocation4], 128, 128, 8
    $region41: #{tpu_custom_call.1} parent=1 // pred_fallthru
      _
    // Predicated region
    $region42: #{tpu_custom_call.1} parent=1 // pred_check
      _
    $region43: #{tpu_custom_call.1} parent=1 // pred_check_branch
      %570 = sbr.rel (0) target = $region45
    $region44: #{tpu_custom_call.1} parent=1 // pred_region
      %571 = dma.done [#allocation4], 256
    $region45: #{tpu_custom_call.1} parent=1 // pred_fallthru
      _
    %572 = vsyncpa [#allocation3], 1
    %573 = vsyncpa [#allocation6], 1
    %574 = vsyncpa [#allocation9], 1
    %575 = vsyncpa [#allocation4], 1

// kernel: tpu_custom_call.1
$region0: #{tpu_custom_call.1}
  #allocation0 [shape = 'u32[]', space=smem, size = 0x4, offset = 0x4, fixed_abs, tag = 'smem constant byte address 0x4 - core index']
  #allocation1 [shape = 'u32[144,128]{1,0:T(1,128)}', space=vmem, size = 0x12000, scoped, tag = 'internal scratch']
  %s0 = inlined_call_operand.hbm [shape: f32[16,128], index: 0, kind: input, shape index: {}]
  %s1 = inlined_call_operand.hbm [shape: bf16[2,128,256], index: 1, kind: input, shape index: {}]
  %s2 = inlined_call_operand.hbm [shape: f32[2,1,256], index: 2, kind: input, shape index: {}]
  %s3 = inlined_call_operand.hbm [shape: bf16[128,128], index: 3, kind: input, shape index: {}]
  %s4 = inlined_call_operand.vmem [shape: f32[1,128], index: 4, kind: input, shape index: {}]
  %s5 = inlined_call_operand.hbm [shape: f32[16,128], index: 5, kind: output, shape index: {}]
  %s6 = sld [smem:[#allocation0]]
  $region46: #{tpu_custom_call.1} parent=0
    _
  %s8 = ssub.s32 1, %s6
  %s9 = scalar_select 0, %s8, %s6
  $region1: #{tpu_custom_call.1} parent=0
    #allocation2 [shape = 'u8[8192]{0}', space=vmem, size = 0x2000, scoped, tag = 'input window, operand 0, single buffered']
    #allocation3 [shape = 's32[1]{0}', space=sflag, size = 0x4, scoped, tag = 'scoped memory for tpu_custom_call.1']
    #allocation4 [shape = 's32[1]{0}', space=sflag, size = 0x4, scoped, tag = 'scoped memory for tpu_custom_call.1']
    #allocation5 [shape = 'u8[131072]{0}', space=vmem, size = 0x20000, scoped, tag = 'input window, operand 1, single buffered']
    #allocation6 [shape = 's32[1]{0}', space=sflag, size = 0x4, scoped, tag = 'scoped memory for tpu_custom_call.1']
    #allocation7 [shape = 'u8[2048]{0}', space=vmem, size = 0x800, scoped, tag = 'input window, operand 2, single buffered']
    #allocation8 [shape = 'u8[32768]{0}', space=vmem, size = 0x8000, scoped, tag = 'input window, operand 3, single buffered']
    #allocation9 [shape = 's32[1]{0}', space=sflag, size = 0x4, scoped, tag = 'scoped memory for tpu_custom_call.1']
    #allocation10 [shape = 'u8[8192]{0}', space=vmem, size = 0x2000, scoped, tag = 'output window, operand 0, single buffered']
    %10 = vsyncpa [#allocation3], 0
    %11 = vsyncpa [#allocation6], 0
    %12 = vsyncpa [#allocation9], 0
    %13 = vsyncpa [#allocation4], 0
    // Predicated region
    $region2: #{tpu_custom_call.1} parent=1 // pred_check
      _
    $region3: #{tpu_custom_call.1} parent=1 // pred_check_branch
      %15 = sbr.rel (0) target = $region5
    $region4: #{tpu_custom_call.1} parent=1 // pred_region
      %s17 = ssub.s32 256, 256
      %18 = vsyncadd [#allocation3], %s17
      %s19 = sshll.u32 [#allocation2], 4
      %s20 = int_to_ptr.vmem [resolvable:$true] %s19
      %25 = dma.hbm_to_vmem [thread:$0]  %s0, 256, %s20, [#allocation3], 128, 128, 8
    $region5: #{tpu_custom_call.1} parent=1 // pred_fallthru
      _
    // Predicated region
    $region6: #{tpu_custom_call.1} parent=1 // pred_check
      _
    $region7: #{tpu_custom_call.1} parent=1 // pred_check_branch
      %27 = sbr.rel (0) target = $region9
    $region8: #{tpu_custom_call.1} parent=1 // pred_region
      %s29 = ssub.s32 4096, 4096
      %30 = vsyncadd [#allocation6], %s29
      %s31 = sshll.u32 [#allocation5], 4
      %s32 = int_to_ptr.vmem [resolvable:$true] %s31
      %37 = dma.hbm_to_vmem [thread:$0]  %s1, 4096, %s32, [#allocation6], 128, 128, 8
    $region9: #{tpu_custom_call.1} parent=1 // pred_fallthru
      _
    // Predicated region
    $region10: #{tpu_custom_call.1} parent=1 // pred_check
      _
    $region11: #{tpu_custom_call.1} parent=1 // pred_check_branch
      %39 = sbr.rel (0) target = $region13
    $region12: #{tpu_custom_call.1} parent=1 // pred_region
      %s41 = ssub.s32 64, 64
      %42 = vsyncadd [#allocation6], %s41
      %s43 = sshll.u32 [#allocation7], 4
      %s44 = int_to_ptr.vmem [resolvable:$true] %s43
      %49 = dma.hbm_to_vmem [thread:$0]  %s2, 64, %s44, [#allocation6], 32, 32, 2
    $region13: #{tpu_custom_call.1} parent=1 // pred_fallthru
      _
    // Predicated region
    $region14: #{tpu_custom_call.1} parent=1 // pred_check
      _
    $region15: #{tpu_custom_call.1} parent=1 // pred_check_branch
      %51 = sbr.rel (0) target = $region17
    $region16: #{tpu_custom_call.1} parent=1 // pred_region
      %s53 = ssub.s32 1024, 1024
      %54 = vsyncadd [#allocation9], %s53
      %s55 = sshll.u32 [#allocation8], 4
      %s56 = int_to_ptr.vmem [resolvable:$true] %s55
      %61 = dma.hbm_to_vmem [thread:$0]  %s3, 1024, %s56, [#allocation9], 64, 64, 4
    $region17: #{tpu_custom_call.1} parent=1 // pred_fallthru
      _
    // Predicated region
    $region18: #{tpu_custom_call.1} parent=1 // pred_check
      _
    $region19: #{tpu_custom_call.1} parent=1 // pred_check_branch
      %63 = sbr.rel (0) target = $region21
    $region20: #{tpu_custom_call.1} parent=1 // pred_region
      _
    $region21: #{tpu_custom_call.1} parent=1 // pred_fallthru
      _
    // Predicated region
    $region22: #{tpu_custom_call.1} parent=1 // pred_check
      _
    $region23: #{tpu_custom_call.1} parent=1 // pred_check_branch
      %65 = sbr.rel (0) target = $region25
    $region24: #{tpu_custom_call.1} parent=1 // pred_region
      %66 = dma.done [#allocation3], 256
    $region25: #{tpu_custom_call.1} parent=1 // pred_fallthru
      _
    // Predicated region
    $region26: #{tpu_custom_call.1} parent=1 // pred_check
      _
    $region27: #{tpu_custom_call.1} parent=1 // pred_check_branch
      %68 = sbr.rel (0) target = $region29
    $region28: #{tpu_custom_call.1} parent=1 // pred_region
      %69 = dma.done [#allocation6], 4096
    $region29: #{tpu_custom_call.1} parent=1 // pred_fallthru
      _
    // Predicated region
    $region30: #{tpu_custom_call.1} parent=1 // pred_check
      _
    $region31: #{tpu_custom_call.1} parent=1 // pred_check_branch
      %71 = sbr.rel (0) target = $region33
    $region32: #{tpu_custom_call.1} parent=1 // pred_region
      %72 = dma.done [#allocation6], 64
    $region33: #{tpu_custom_call.1} parent=1 // pred_fallthru
      _
    // Predicated region
    $region34: #{tpu_custom_call.1} parent=1 // pred_check
      _
    $region35: #{tpu_custom_call.1} parent=1 // pred_check_branch
      %74 = sbr.rel (0) target = $region37
    $region36: #{tpu_custom_call.1} parent=1 // pred_region
      %75 = dma.done [#allocation9], 1024
    $region37: #{tpu_custom_call.1} parent=1 // pred_fallthru
      _
    %v77 = vld [vmem:[#allocation2] sm:$0xff]
    %v78 = vld [vmem:[#allocation2 + $0x8] sm:$0xff]
    %v79 = vpack.c.bf16 %v78, %v77
    %v80 = vld [vmem:[#allocation5] sm:$0xff]
    %v81 = vld [vmem:[#allocation5 + $0x8] sm:$0xff]
    %v82 = vld [vmem:[#allocation5 + $0x10] sm:$0xff]
    %v83 = vld [vmem:[#allocation5 + $0x18] sm:$0xff]
    %v84 = vld [vmem:[#allocation5 + $0x20] sm:$0xff]
    %v85 = vld [vmem:[#allocation5 + $0x28] sm:$0xff]
    %v86 = vld [vmem:[#allocation5 + $0x30] sm:$0xff]
    %v87 = vld [vmem:[#allocation5 + $0x38] sm:$0xff]
    %v88 = vld [vmem:[#allocation5 + $0x40] sm:$0xff]
    %v89 = vld [vmem:[#allocation5 + $0x48] sm:$0xff]
    %v90 = vld [vmem:[#allocation5 + $0x50] sm:$0xff]
    %v91 = vld [vmem:[#allocation5 + $0x58] sm:$0xff]
    %v92 = vld [vmem:[#allocation5 + $0x60] sm:$0xff]
    %v93 = vld [vmem:[#allocation5 + $0x68] sm:$0xff]
    %v94 = vld [vmem:[#allocation5 + $0x70] sm:$0xff]
    %v95 = vld [vmem:[#allocation5 + $0x78] sm:$0xff]
    %v96 = vld [vmem:[#allocation7] sm:$0x3]
    %v98 = vlaneseq
    %v99 = vshrl.u32 %v98, 7
    %v100 = vsub.s32 0, %v99
    %v101 = vrot.slane %v96, %v100
    %v102 = vlaneseq
    %v103 = vshrl.u32 %v102, 7
    %v104 = vsub.s32 1, %v103
    %v105 = vrot.slane %v96, %v104
    %v124 = vunpack.c.l.b16 %v80
    %v125 = vunpack.c.h.b16 %v80
    %v126 = vunpack.c.l.b16 %v81
    %v127 = vunpack.c.h.b16 %v81
    %v128 = vunpack.c.l.b16 %v82
    %v129 = vunpack.c.h.b16 %v82
    %v130 = vunpack.c.l.b16 %v83
    %v131 = vunpack.c.h.b16 %v83
    %v132 = vunpack.c.l.b16 %v84
    %v133 = vunpack.c.h.b16 %v84
    %v134 = vunpack.c.l.b16 %v85
    %v135 = vunpack.c.h.b16 %v85
    %v136 = vunpack.c.l.b16 %v86
    %v137 = vunpack.c.h.b16 %v86
    %v138 = vunpack.c.l.b16 %v87
    %v139 = vunpack.c.h.b16 %v87
    %v140 = vunpack.c.l.b16 %v88
    %v141 = vunpack.c.h.b16 %v88
    %v142 = vunpack.c.l.b16 %v89
    %v143 = vunpack.c.h.b16 %v89
    %v144 = vunpack.c.l.b16 %v90
    %v145 = vunpack.c.h.b16 %v90
    %v146 = vunpack.c.l.b16 %v91
    %v147 = vunpack.c.h.b16 %v91
    %v148 = vunpack.c.l.b16 %v92
    %v149 = vunpack.c.h.b16 %v92
    %v150 = vunpack.c.l.b16 %v93
    %v151 = vunpack.c.h.b16 %v93
    %v152 = vunpack.c.l.b16 %v94
    %v153 = vunpack.c.h.b16 %v94
    %v154 = vunpack.c.l.b16 %v95
    %v155 = vunpack.c.h.b16 %v95
    %v156 = vpack.c.b16 %v126, %v124
    %v157 = vpack.c.b16 %v127, %v125
    %v158 = vpack.c.b16 %v130, %v128
    %v159 = vpack.c.b16 %v131, %v129
    %v160 = vpack.c.b16 %v134, %v132
    %v161 = vpack.c.b16 %v135, %v133
    %v162 = vpack.c.b16 %v138, %v136
    %v163 = vpack.c.b16 %v139, %v137
    %v164 = vpack.c.b16 %v142, %v140
    %v165 = vpack.c.b16 %v143, %v141
    %v166 = vpack.c.b16 %v146, %v144
    %v167 = vpack.c.b16 %v147, %v145
    %v168 = vpack.c.b16 %v150, %v148
    %v169 = vpack.c.b16 %v151, %v149
    %v170 = vpack.c.b16 %v154, %v152
    %v171 = vpack.c.b16 %v155, %v153
    %188 = vmatprep.subr.bf16.mxu0 %v171
    %189 = vmatpush1.bf16.msra.mxu0 %v170
    %190 = vmatprep.subr.bf16.mxu0 %v169
    %191 = vmatpush1.bf16.msra.mxu0 %v168
    %192 = vmatprep.subr.bf16.mxu0 %v167
    %193 = vmatpush1.bf16.msra.mxu0 %v166
    %194 = vmatprep.subr.bf16.mxu0 %v165
    %195 = vmatpush1.bf16.msra.mxu0 %v164
    %196 = vmatprep.subr.bf16.mxu0 %v163
    %197 = vmatpush1.bf16.msra.mxu0 %v162
    %198 = vmatprep.subr.bf16.mxu0 %v161
    %199 = vmatpush1.bf16.msra.mxu0 %v160
    %200 = vmatprep.subr.bf16.mxu0 %v159
    %201 = vmatpush1.bf16.msra.mxu0 %v158
    %202 = vmatprep.subr.bf16.mxu0 %v157
    %203 = vmatpush1.bf16.msra.mxu0 %v156
    %204 = vmatprep.subr.bf16.mxu0 0
    %205 = vmatpush2.bf16.msra.mxu0 0
    %206 = vmatprep.subr.bf16.mxu0 0
    %207 = vmatpush2.bf16.msra.mxu0 0
    %208 = vmatprep.subr.bf16.mxu0 0
    %209 = vmatpush2.bf16.msra.mxu0 0
    %210 = vmatprep.subr.bf16.mxu0 0
    %211 = vmatpush2.bf16.msra.mxu0 0
    %212 = vmatprep.subr.bf16.mxu0 0
    %213 = vmatpush2.bf16.msra.mxu0 0
    %214 = vmatprep.subr.bf16.mxu0 0
    %215 = vmatpush2.bf16.msra.mxu0 0
    %216 = vmatprep.subr.bf16.mxu0 0
    %217 = vmatpush2.bf16.msra.mxu0 0
    %218 = vmatprep.subr.bf16.mxu0 0
    %219 = vmatpush2.bf16.msra.mxu0 0
    %220 = vmatprep.mubr.bf16.mxu0 0
    %221 = vmatmul.mubr.bf16.gmra.mxu0 %v79
    %v222 = vpop.f32.mrf.mxu0
    %v223 = vadd.f32 %v101, %v222
    %v224 = vpop.f32.mrf.mxu0
    %v225 = vadd.f32 %v105, %v224
    %v226 = vpop.f32.mrf.mxu0
    %v227 = vadd.f32 %v101, %v226
    %v228 = vpop.f32.mrf.mxu0
    %v229 = vadd.f32 %v105, %v228
    %230 = vdwg.mxu0
    %v231 = vmul.f32 %v223, 0.5
    %v232 = vmul.f32 %v227, 0.5
    %v233 = vrcp.pop 1.4142135
    %v234 = vmul.f32 %v223, %v233
    %v235 = vmul.f32 %v227, %v233
    %v236 = verf.f32.pop %v234
    %v237 = verf.f32.pop %v235
    %v238 = vadd.f32 %v236, 1.0
    %v239 = vadd.f32 %v237, 1.0
    %v240 = vmul.f32 %v231, %v238
    %v241 = vmul.f32 %v232, %v239
    %v242 = vxor.u32 %v225, 2147483648
    %v243 = vxor.u32 %v229, 2147483648
    %v244 = vmul.f32 %v242, 1.442695
    %v245 = vpow.pop %v244
    %v246 = vmul.f32 %v243, 1.442695
    %v247 = vpow.pop %v246
    %v248 = vadd.f32 %v245, 1.0
    %v249 = vadd.f32 %v247, 1.0
    %v250 = vrcp.pop %v248
    %v251 = vmul.f32 1.0, %v250
    %v252 = vrcp.pop %v249
    %v253 = vmul.f32 1.0, %v252
    %v254 = vsub.f32 %v240, %v77
    %v255 = vsub.f32 %v241, %v78
    %v256 = vmul.f32 %v251, %v254
    %v257 = vmul.f32 %v253, %v255
    %v258 = vadd.f32 %v77, %v256
    %v259 = vadd.f32 %v78, %v257
    %v260 = vpack.c.bf16 %v259, %v258
    %s261 = scalar_lea.vmem [#allocation5], 128
    %v262 = vld [vmem:[%s261] sm:$0xff]
    %v263 = vld [vmem:[%s261 + $0x8] sm:$0xff]
    %v264 = vld [vmem:[%s261 + $0x10] sm:$0xff]
    %v265 = vld [vmem:[%s261 + $0x18] sm:$0xff]
    %v266 = vld [vmem:[%s261 + $0x20] sm:$0xff]
    %v267 = vld [vmem:[%s261 + $0x28] sm:$0xff]
    %v268 = vld [vmem:[%s261 + $0x30] sm:$0xff]
    %v269 = vld [vmem:[%s261 + $0x38] sm:$0xff]
    %v270 = vld [vmem:[%s261 + $0x40] sm:$0xff]
    %v271 = vld [vmem:[%s261 + $0x48] sm:$0xff]
    %v272 = vld [vmem:[%s261 + $0x50] sm:$0xff]
    %v273 = vld [vmem:[%s261 + $0x58] sm:$0xff]
    %v274 = vld [vmem:[%s261 + $0x60] sm:$0xff]
    %v275 = vld [vmem:[%s261 + $0x68] sm:$0xff]
    %v276 = vld [vmem:[%s261 + $0x70] sm:$0xff]
    %v277 = vld [vmem:[%s261 + $0x78] sm:$0xff]
    %s278 = scalar_lea.vmem [#allocation7], 2
    %v279 = vld [vmem:[%s278] sm:$0x3]
    %v281 = vlaneseq
    %v282 = vshrl.u32 %v281, 7
    %v283 = vsub.s32 0, %v282
    %v284 = vrot.slane %v279, %v283
    %v285 = vlaneseq
    %v286 = vshrl.u32 %v285, 7
    %v287 = vsub.s32 1, %v286
    %v288 = vrot.slane %v279, %v287
    %v307 = vunpack.c.l.b16 %v262
    %v308 = vunpack.c.h.b16 %v262
    %v309 = vunpack.c.l.b16 %v263
    %v310 = vunpack.c.h.b16 %v263
    %v311 = vunpack.c.l.b16 %v264
    %v312 = vunpack.c.h.b16 %v264
    %v313 = vunpack.c.l.b16 %v265
    %v314 = vunpack.c.h.b16 %v265
    %v315 = vunpack.c.l.b16 %v266
    %v316 = vunpack.c.h.b16 %v266
    %v317 = vunpack.c.l.b16 %v267
    %v318 = vunpack.c.h.b16 %v267
    %v319 = vunpack.c.l.b16 %v268
    %v320 = vunpack.c.h.b16 %v268
    %v321 = vunpack.c.l.b16 %v269
    %v322 = vunpack.c.h.b16 %v269
    %v323 = vunpack.c.l.b16 %v270
    %v324 = vunpack.c.h.b16 %v270
    %v325 = vunpack.c.l.b16 %v271
    %v326 = vunpack.c.h.b16 %v271
    %v327 = vunpack.c.l.b16 %v272
    %v328 = vunpack.c.h.b16 %v272
    %v329 = vunpack.c.l.b16 %v273
    %v330 = vunpack.c.h.b16 %v273
    %v331 = vunpack.c.l.b16 %v274
    %v332 = vunpack.c.h.b16 %v274
    %v333 = vunpack.c.l.b16 %v275
    %v334 = vunpack.c.h.b16 %v275
    %v335 = vunpack.c.l.b16 %v276
    %v336 = vunpack.c.h.b16 %v276
    %v337 = vunpack.c.l.b16 %v277
    %v338 = vunpack.c.h.b16 %v277
    %v339 = vpack.c.b16 %v309, %v307
    %v340 = vpack.c.b16 %v310, %v308
    %v341 = vpack.c.b16 %v313, %v311
    %v342 = vpack.c.b16 %v314, %v312
    %v343 = vpack.c.b16 %v317, %v315
    %v344 = vpack.c.b16 %v318, %v316
    %v345 = vpack.c.b16 %v321, %v319
    %v346 = vpack.c.b16 %v322, %v320
    %v347 = vpack.c.b16 %v325, %v323
    %v348 = vpack.c.b16 %v326, %v324
    %v349 = vpack.c.b16 %v329, %v327
    %v350 = vpack.c.b16 %v330, %v328
    %v351 = vpack.c.b16 %v333, %v331
    %v352 = vpack.c.b16 %v334, %v332
    %v353 = vpack.c.b16 %v337, %v335
    %v354 = vpack.c.b16 %v338, %v336
    %371 = vmatprep.subr.bf16.mxu0 %v354
    %372 = vmatpush1.bf16.msra.mxu0 %v353
    %373 = vmatprep.subr.bf16.mxu0 %v352
    %374 = vmatpush1.bf16.msra.mxu0 %v351
    %375 = vmatprep.subr.bf16.mxu0 %v350
    %376 = vmatpush1.bf16.msra.mxu0 %v349
    %377 = vmatprep.subr.bf16.mxu0 %v348
    %378 = vmatpush1.bf16.msra.mxu0 %v347
    %379 = vmatprep.subr.bf16.mxu0 %v346
    %380 = vmatpush1.bf16.msra.mxu0 %v345
    %381 = vmatprep.subr.bf16.mxu0 %v344
    %382 = vmatpush1.bf16.msra.mxu0 %v343
    %383 = vmatprep.subr.bf16.mxu0 %v342
    %384 = vmatpush1.bf16.msra.mxu0 %v341
    %385 = vmatprep.subr.bf16.mxu0 %v340
    %386 = vmatpush1.bf16.msra.mxu0 %v339
    %387 = vmatprep.subr.bf16.mxu0 0
    %388 = vmatpush2.bf16.msra.mxu0 0
    %389 = vmatprep.subr.bf16.mxu0 0
    %390 = vmatpush2.bf16.msra.mxu0 0
    %391 = vmatprep.subr.bf16.mxu0 0
    %392 = vmatpush2.bf16.msra.mxu0 0
    %393 = vmatprep.subr.bf16.mxu0 0
    %394 = vmatpush2.bf16.msra.mxu0 0
    %395 = vmatprep.subr.bf16.mxu0 0
    %396 = vmatpush2.bf16.msra.mxu0 0
    %397 = vmatprep.subr.bf16.mxu0 0
    %398 = vmatpush2.bf16.msra.mxu0 0
    %399 = vmatprep.subr.bf16.mxu0 0
    %400 = vmatpush2.bf16.msra.mxu0 0
    %401 = vmatprep.subr.bf16.mxu0 0
    %402 = vmatpush2.bf16.msra.mxu0 0
    %403 = vmatprep.mubr.bf16.mxu0 0
    %404 = vmatmul.mubr.bf16.gmra.mxu0 %v260
    %v405 = vpop.f32.mrf.mxu0
    %v406 = vadd.f32 %v284, %v405
    %v407 = vpop.f32.mrf.mxu0
    %v408 = vadd.f32 %v288, %v407
    %v409 = vpop.f32.mrf.mxu0
    %v410 = vadd.f32 %v284, %v409
    %v411 = vpop.f32.mrf.mxu0
    %v412 = vadd.f32 %v288, %v411
    %413 = vdwg.mxu0
    %v414 = vmul.f32 %v406, 0.5
    %v415 = vmul.f32 %v410, 0.5
    %v416 = vmul.f32 %v406, %v233
    %v417 = vmul.f32 %v410, %v233
    %v418 = verf.f32.pop %v416
    %v419 = verf.f32.pop %v417
    %v420 = vadd.f32 %v418, 1.0
    %v421 = vadd.f32 %v419, 1.0
    %v422 = vmul.f32 %v414, %v420
    %v423 = vmul.f32 %v415, %v421
    %v424 = vxor.u32 %v408, 2147483648
    %v425 = vxor.u32 %v412, 2147483648
    %v426 = vmul.f32 %v424, 1.442695
    %v427 = vpow.pop %v426
    %v428 = vmul.f32 %v425, 1.442695
    %v429 = vpow.pop %v428
    %v430 = vadd.f32 %v427, 1.0
    %v431 = vadd.f32 %v429, 1.0
    %v432 = vrcp.pop %v430
    %v433 = vmul.f32 1.0, %v432
    %v434 = vrcp.pop %v431
    %v435 = vmul.f32 1.0, %v434
    %v436 = vsub.f32 %v422, %v258
    %v437 = vsub.f32 %v423, %v259
    %v438 = vmul.f32 %v433, %v436
    %v439 = vmul.f32 %v435, %v437
    %v440 = vadd.f32 %v258, %v438
    %v441 = vadd.f32 %v259, %v439
    %v442 = vpack.c.bf16 %v441, %v440
    %v443 = vld [vmem:[#allocation8] sm:$0xf]
    %v444 = vld [vmem:[#allocation8 + $0x4] sm:$0xf]
    %v445 = vld [vmem:[#allocation8 + $0x8] sm:$0xf]
    %v446 = vld [vmem:[#allocation8 + $0xc] sm:$0xf]
    %v447 = vld [vmem:[#allocation8 + $0x10] sm:$0xf]
    %v448 = vld [vmem:[#allocation8 + $0x14] sm:$0xf]
    %v449 = vld [vmem:[#allocation8 + $0x18] sm:$0xf]
    %v450 = vld [vmem:[#allocation8 + $0x1c] sm:$0xf]
    %v451 = vld [vmem:[#allocation8 + $0x20] sm:$0xf]
    %v452 = vld [vmem:[#allocation8 + $0x24] sm:$0xf]
    %v453 = vld [vmem:[#allocation8 + $0x28] sm:$0xf]
    %v454 = vld [vmem:[#allocation8 + $0x2c] sm:$0xf]
    %v455 = vld [vmem:[#allocation8 + $0x30] sm:$0xf]
    %v456 = vld [vmem:[#allocation8 + $0x34] sm:$0xf]
    %v457 = vld [vmem:[#allocation8 + $0x38] sm:$0xf]
    %v458 = vld [vmem:[#allocation8 + $0x3c] sm:$0xf]
    %v459 = vld [vmem:[%s4] sm:$0x1]
    %v461 = vlaneseq
    %v462 = vshrl.u32 %v461, 7
    %v463 = vsub.s32 0, %v462
    %v464 = vrot.slane %v459, %v463
    %v482 = vunpack.c.l.b16 %v443
    %v483 = vunpack.c.l.b16 %v444
    %v484 = vunpack.c.l.b16 %v445
    %v485 = vunpack.c.l.b16 %v446
    %v486 = vunpack.c.l.b16 %v447
    %v487 = vunpack.c.l.b16 %v448
    %v488 = vunpack.c.l.b16 %v449
    %v489 = vunpack.c.l.b16 %v450
    %v490 = vunpack.c.l.b16 %v451
    %v491 = vunpack.c.l.b16 %v452
    %v492 = vunpack.c.l.b16 %v453
    %v493 = vunpack.c.l.b16 %v454
    %v494 = vunpack.c.l.b16 %v455
    %v495 = vunpack.c.l.b16 %v456
    %v496 = vunpack.c.l.b16 %v457
    %v497 = vunpack.c.l.b16 %v458
    %v498 = vpack.c.b16 %v483, %v482
    %v499 = vpack.c.b16 %v485, %v484
    %v500 = vpack.c.b16 %v487, %v486
    %v501 = vpack.c.b16 %v489, %v488
    %v502 = vpack.c.b16 %v491, %v490
    %v503 = vpack.c.b16 %v493, %v492
    %v504 = vpack.c.b16 %v495, %v494
    %v505 = vpack.c.b16 %v497, %v496
    %514 = vmatprep.subr.bf16.mxu0 0
    %515 = vmatpush1.bf16.msra.mxu0 %v505
    %516 = vmatprep.subr.bf16.mxu0 0
    %517 = vmatpush1.bf16.msra.mxu0 %v504
    %518 = vmatprep.subr.bf16.mxu0 0
    %519 = vmatpush1.bf16.msra.mxu0 %v503
    %520 = vmatprep.subr.bf16.mxu0 0
    %521 = vmatpush1.bf16.msra.mxu0 %v502
    %522 = vmatprep.subr.bf16.mxu0 0
    %523 = vmatpush1.bf16.msra.mxu0 %v501
    %524 = vmatprep.subr.bf16.mxu0 0
    %525 = vmatpush1.bf16.msra.mxu0 %v500
    %526 = vmatprep.subr.bf16.mxu0 0
    %527 = vmatpush1.bf16.msra.mxu0 %v499
    %528 = vmatprep.subr.bf16.mxu0 0
    %529 = vmatpush1.bf16.msra.mxu0 %v498
    %530 = vmatprep.subr.bf16.mxu0 0
    %531 = vmatpush2.bf16.msra.mxu0 0
    %532 = vmatprep.subr.bf16.mxu0 0
    %533 = vmatpush2.bf16.msra.mxu0 0
    %534 = vmatprep.subr.bf16.mxu0 0
    %535 = vmatpush2.bf16.msra.mxu0 0
    %536 = vmatprep.subr.bf16.mxu0 0
    %537 = vmatpush2.bf16.msra.mxu0 0
    %538 = vmatprep.subr.bf16.mxu0 0
    %539 = vmatpush2.bf16.msra.mxu0 0
    %540 = vmatprep.subr.bf16.mxu0 0
    %541 = vmatpush2.bf16.msra.mxu0 0
    %542 = vmatprep.subr.bf16.mxu0 0
    %543 = vmatpush2.bf16.msra.mxu0 0
    %544 = vmatprep.subr.bf16.mxu0 0
    %545 = vmatpush2.bf16.msra.mxu0 0
    %546 = vmatprep.mubr.bf16.mxu0 0
    %547 = vmatmul.mubr.bf16.gmra.mxu0 %v442
    %v548 = vpop.f32.mrf.mxu0
    %v549 = vadd.f32 %v464, %v548
    %v550 = vpop.f32.mrf.mxu0
    %v551 = vpop.f32.mrf.mxu0
    %v552 = vadd.f32 %v464, %v551
    %v553 = vpop.f32.mrf.mxu0
    %554 = vdwg.mxu0
    %555 = vst [vmem:[#allocation10] sm:$0xff] %v549
    %556 = vst [vmem:[#allocation10 + $0x8] sm:$0xff] %v552
    // Predicated region
    $region38: #{tpu_custom_call.1} parent=1 // pred_check
      _
    $region39: #{tpu_custom_call.1} parent=1 // pred_check_branch
      %558 = sbr.rel (0) target = $region41
    $region40: #{tpu_custom_call.1} parent=1 // pred_region
      %s560 = ssub.s32 256, 256
      %561 = vsyncadd [#allocation4], %s560
      %s562 = sshll.u32 [#allocation10], 4
      %s563 = int_to_ptr.vmem [resolvable:$true] %s562
      %568 = dma.vmem_to_hbm [thread:$0]  %s563, 256, %s5, [#allocation4], 128, 128, 8
    $region41: #{tpu_custom_call.1} parent=1 // pred_fallthru
      _
    // Predicated region
    $region42: #{tpu_custom_call.1} parent=1 // pred_check
      _
    $region43: #{tpu_custom_call.1} parent=1 // pred_check_branch
      %570 = sbr.rel (0) target = $region45
    $region44: #{tpu_custom_call.1} parent=1 // pred_region
      %571 = dma.done [#allocation4], 256
    $region45: #{tpu_custom_call.1} parent=1 // pred_fallthru
      _
    %572 = vsyncpa [#allocation3], 1
    %573 = vsyncpa [#allocation6], 1
    %574 = vsyncpa [#allocation9], 1
    %575 = vsyncpa [#allocation4], 1

</llo_original>
